<compile_context>
chip_gen: v5e
topology: v5e:2x2
jax: 0.10.0
libtpu: 0.0.40
codegen_flags: <defaults>
</compile_context>

<pallas_src>
import functools

import jax
import jax.numpy as jnp
from jax import lax
from jax.experimental import pallas as pl
from jax.experimental.pallas import tpu as pltpu

LANE = 128
SUBLANE = 8


def _round_up(n, m):
    return ((n + m - 1) // m) * m


def mlp_kernel(x_ref, w1_ref, b1_ref, w2_ref, b2_ref, w3_ref, b3_ref, o_ref, *, num_out):
    # Layer 1: bf16 MXU matmul, f32 accumulate, f32 elementwise.
    h = jnp.dot(x_ref[...], w1_ref[...], preferred_element_type=jnp.float32)
    h = jnp.tanh(h + b1_ref[...])

    # Layer 2.
    h = jnp.dot(h.astype(jnp.bfloat16), w2_ref[...], preferred_element_type=jnp.float32)
    h = jnp.tanh(h + b2_ref[...])

    # Layer 3.
    z = jnp.dot(h.astype(jnp.bfloat16), w3_ref[...], preferred_element_type=jnp.float32)
    z = jnp.tanh(z + b3_ref[...])

    # log_softmax over the (lane) class axis; exclude zero-padded lanes from the
    # max / logsumexp so the normalizer only covers real classes.
    if z.shape[-1] > num_out:
        lane = lax.broadcasted_iota(jnp.int32, z.shape, dimension=1)
        z = jnp.where(lane < num_out, z, jnp.float32(-1e30))

    m = jnp.max(z, axis=1, keepdims=True)
    s = z - m
    lse = jnp.log(jnp.sum(jnp.exp(s), axis=1, keepdims=True))
    o_ref[...] = s - lse


def prepare_params(w1, b1, w2, b2, w3, b3):
    """Hoisted one-time prep: transpose to (in, out), zero-pad feature dims to
    multiples of 128, cast matmul operands to bf16 (biases stay f32)."""
    num_hid, num_inp = w1.shape
    num_out = w2.shape[0]
    in_p = _round_up(num_inp, LANE)
    hid_p = _round_up(num_hid, LANE)
    out_p = _round_up(num_out, LANE)

    def pad2(a, rows, cols):
        return jnp.pad(a, ((0, rows - a.shape[0]), (0, cols - a.shape[1])))

    def pad1(a, n):
        return jnp.pad(a, (0, n - a.shape[0])).reshape(1, n).astype(jnp.float32)

    return dict(
        w1t=pad2(w1.T, in_p, hid_p).astype(jnp.bfloat16),
        w2t=pad2(w2.T, hid_p, out_p).astype(jnp.bfloat16),
        w3t=pad2(w3.T, out_p, out_p).astype(jnp.bfloat16),
        b1=pad1(b1, hid_p),
        b2=pad1(b2, out_p),
        b3=pad1(b3, out_p),
        num_inp=num_inp, num_hid=num_hid, num_out=num_out,
        in_p=in_p, hid_p=hid_p, out_p=out_p,
    )


def mnist_fc_forward(x, params, *, tile_b=1024):
    batch = x.shape[0]
    in_p, hid_p, out_p = params["in_p"], params["hid_p"], params["out_p"]
    num_out = params["num_out"]

    # Batch tile: multiple of 8 sublanes, capped at tile_b; pad batch to a multiple.
    tb = _round_up(min(tile_b, _round_up(batch, SUBLANE)), SUBLANE)
    padded_batch = _round_up(batch, tb)

    x_p = jnp.pad(
        x, ((0, padded_batch - batch), (0, in_p - x.shape[1]))
    ).astype(jnp.bfloat16)

    grid = (padded_batch // tb,)
    resident = lambda i: (0, 0)  # weights/biases stay put across batch tiles

    kernel = functools.partial(mlp_kernel, num_out=num_out)

    flops = 2 * padded_batch * (in_p * hid_p + hid_p * out_p + out_p * out_p)
    transcendentals = padded_batch * (hid_p + 3 * out_p)  # 3x tanh + exp
    bytes_accessed = (
        x_p.size * 2
        + (params["w1t"].size + params["w2t"].size + params["w3t"].size) * 2
        + (params["b1"].size + params["b2"].size + params["b3"].size) * 4
        + padded_batch * out_p * 4
    )

    out = pl.pallas_call(
        kernel,
        out_shape=jax.ShapeDtypeStruct((padded_batch, out_p), jnp.float32),
        grid=grid,
        in_specs=[
            pl.BlockSpec((tb, in_p), lambda i: (i, 0)),   # x: streamed per batch tile
            pl.BlockSpec((in_p, hid_p), resident),        # w1
            pl.BlockSpec((1, hid_p), resident),           # b1
            pl.BlockSpec((hid_p, out_p), resident),       # w2
            pl.BlockSpec((1, out_p), resident),           # b2
            pl.BlockSpec((out_p, out_p), resident),       # w3
            pl.BlockSpec((1, out_p), resident),           # b3
        ],
        out_specs=pl.BlockSpec((tb, out_p), lambda i: (i, 0)),
        compiler_params=pltpu.CompilerParams(dimension_semantics=("parallel",)),
        cost_estimate=pl.CostEstimate(
            flops=flops, transcendentals=transcendentals, bytes_accessed=bytes_accessed
        ),
    )(x_p, params["w1t"], params["b1"], params["w2t"], params["b2"],
      params["w3t"], params["b3"])

    return out[:batch, :num_out]


def torch_linear_init(key, out_features, in_features):
    """Deterministic init matching nn.Linear defaults: U(-1/sqrt(fan_in), 1/sqrt(fan_in))."""
    kw, kb = jax.random.split(key)
    bound = 1.0 / jnp.sqrt(jnp.float32(in_features))
    w = jax.random.uniform(kw, (out_features, in_features), jnp.float32, -bound, bound)
    b = jax.random.uniform(kb, (out_features,), jnp.float32, -bound, bound)
    return w, b


def reference_forward(x, w1, b1, w2, b2, w3, b3):
    """Pure-JAX f32 reference matching the PyTorch module."""
    h = jnp.tanh(x @ w1.T + b1)
    h = jnp.tanh(h @ w2.T + b2)
    z = jnp.tanh(h @ w3.T + b3)
    return jax.nn.log_softmax(z, axis=1)


if __name__ == "__main__":
    # Small, MNIST-like-but-tiny shapes.
    batch, num_inp, num_hid, num_out = 8, 32, 32, 16

    key = jax.random.PRNGKey(0)
    kx, k1, k2, k3 = jax.random.split(key, 4)

    x = jax.random.normal(kx, (batch, num_inp), jnp.float32)
    w1, b1 = torch_linear_init(k1, num_hid, num_inp)   # layers.l1
    w2, b2 = torch_linear_init(k2, num_out, num_hid)   # layers.l2
    w3, b3 = torch_linear_init(k3, num_out, num_out)   # layers.l3

    params = prepare_params(w1, b1, w2, b2, w3, b3)    # one-time prep (transpose/pad/cast)

    out = mnist_fc_forward(x, params)
    out = jax.block_until_ready(out)

    assert out.shape == (batch, num_out)

    # log_softmax rows must (log-)sum to ~0.
    row_logsumexp = jax.scipy.special.logsumexp(out, axis=1)
    assert bool(jnp.all(jnp.abs(row_logsumexp) < 1e-4))

    # Semantics vs f32 reference (loose tolerance: matmul operands are bf16).
    ref = reference_forward(x, w1, b1, w2, b2, w3, b3)
    assert bool(jnp.max(jnp.abs(out - ref)) < 0.25)

    print("KERNEL_OK")
</pallas_src>

<mosaic_0001>
module attributes {stable_mosaic.version = 11 : i64} {
  func.func @mlp_kernel(%arg0: i32, %arg1: memref<8x128xbf16, #tpu.memory_space<vmem>>, %arg2: memref<128x128xbf16, #tpu.memory_space<vmem>>, %arg3: memref<1x128xf32, #tpu.memory_space<vmem>>, %arg4: memref<128x128xbf16, #tpu.memory_space<vmem>>, %arg5: memref<1x128xf32, #tpu.memory_space<vmem>>, %arg6: memref<128x128xbf16, #tpu.memory_space<vmem>>, %arg7: memref<1x128xf32, #tpu.memory_space<vmem>>, %arg8: memref<8x128xf32, #tpu.memory_space<vmem>>) attributes {dimension_semantics = [#tpu.dimension_semantics<parallel>], iteration_bounds = array<i64: 1>, scalar_prefetch = 0 : i64, scratch_operands = 0 : i64, tpu.core_type = #tpu.core_type<tc>, window_params = [{transform_indices = @transform_0, window_bounds = array<i64: 8, 128>}, {pipeline_mode = #tpu.pipeline_mode<synchronous>, transform_indices = @transform_1, window_bounds = array<i64: 128, 128>}, {pipeline_mode = #tpu.pipeline_mode<synchronous>, transform_indices = @transform_2, window_bounds = array<i64: 1, 128>}, {pipeline_mode = #tpu.pipeline_mode<synchronous>, transform_indices = @transform_3, window_bounds = array<i64: 128, 128>}, {pipeline_mode = #tpu.pipeline_mode<synchronous>, transform_indices = @transform_4, window_bounds = array<i64: 1, 128>}, {pipeline_mode = #tpu.pipeline_mode<synchronous>, transform_indices = @transform_5, window_bounds = array<i64: 128, 128>}, {pipeline_mode = #tpu.pipeline_mode<synchronous>, transform_indices = @transform_6, window_bounds = array<i64: 1, 128>}, {transform_indices = @transform_7, window_bounds = array<i64: 8, 128>}]} {
    %c0 = arith.constant 0 : index
    %c0_0 = arith.constant 0 : index
    %0 = vector.load %arg1[%c0, %c0_0] : memref<8x128xbf16, #tpu.memory_space<vmem>>, vector<8x128xbf16>
    %c0_1 = arith.constant 0 : index
    %c0_2 = arith.constant 0 : index
    %1 = vector.load %arg2[%c0_1, %c0_2] : memref<128x128xbf16, #tpu.memory_space<vmem>>, vector<128x128xbf16>
    %cst = arith.constant dense<0.000000e+00> : vector<8x128xf32>
    %2 = tpu.matmul %0, %1, %cst {dimension_numbers = #tpu.dot_dimension_numbers<[1], [0], [0], [1], [0, 0, 1, 1], [], []>} : vector<8x128xbf16>, vector<128x128xbf16>, vector<8x128xf32> -> vector<8x128xf32>
    %c0_3 = arith.constant 0 : index
    %c0_4 = arith.constant 0 : index
    %3 = vector.load %arg3[%c0_3, %c0_4] : memref<1x128xf32, #tpu.memory_space<vmem>>, vector<1x128xf32>
    %4 = vector.broadcast %3 : vector<1x128xf32> to vector<8x128xf32>
    %5 = arith.addf %2, %4 : vector<8x128xf32>
    %6 = math.tanh %5 : vector<8x128xf32>
    %7 = arith.truncf %6 : vector<8x128xf32> to vector<8x128xbf16>
    %c0_5 = arith.constant 0 : index
    %c0_6 = arith.constant 0 : index
    %8 = vector.load %arg4[%c0_5, %c0_6] : memref<128x128xbf16, #tpu.memory_space<vmem>>, vector<128x128xbf16>
    %cst_7 = arith.constant dense<0.000000e+00> : vector<8x128xf32>
    %9 = tpu.matmul %7, %8, %cst_7 {dimension_numbers = #tpu.dot_dimension_numbers<[1], [0], [0], [1], [0, 0, 1, 1], [], []>} : vector<8x128xbf16>, vector<128x128xbf16>, vector<8x128xf32> -> vector<8x128xf32>
    %c0_8 = arith.constant 0 : index
    %c0_9 = arith.constant 0 : index
    %10 = vector.load %arg5[%c0_8, %c0_9] : memref<1x128xf32, #tpu.memory_space<vmem>>, vector<1x128xf32>
    %11 = vector.broadcast %10 : vector<1x128xf32> to vector<8x128xf32>
    %12 = arith.addf %9, %11 : vector<8x128xf32>
    %13 = math.tanh %12 : vector<8x128xf32>
    %14 = arith.truncf %13 : vector<8x128xf32> to vector<8x128xbf16>
    %c0_10 = arith.constant 0 : index
    %c0_11 = arith.constant 0 : index
    %15 = vector.load %arg6[%c0_10, %c0_11] : memref<128x128xbf16, #tpu.memory_space<vmem>>, vector<128x128xbf16>
    %cst_12 = arith.constant dense<0.000000e+00> : vector<8x128xf32>
    %16 = tpu.matmul %14, %15, %cst_12 {dimension_numbers = #tpu.dot_dimension_numbers<[1], [0], [0], [1], [0, 0, 1, 1], [], []>} : vector<8x128xbf16>, vector<128x128xbf16>, vector<8x128xf32> -> vector<8x128xf32>
    %c0_13 = arith.constant 0 : index
    %c0_14 = arith.constant 0 : index
    %17 = vector.load %arg7[%c0_13, %c0_14] : memref<1x128xf32, #tpu.memory_space<vmem>>, vector<1x128xf32>
    %18 = vector.broadcast %17 : vector<1x128xf32> to vector<8x128xf32>
    %19 = arith.addf %16, %18 : vector<8x128xf32>
    %20 = math.tanh %19 : vector<8x128xf32>
    %21 = tpu.iota {dimensions = array<i32: 1>} : vector<8x128xi32>
    %c16_i32 = arith.constant 16 : i32
    %22 = vector.broadcast %c16_i32 : i32 to vector<8x128xi32>
    %23 = arith.cmpi slt, %21, %22 : vector<8x128xi32>
    %cst_15 = arith.constant -1.000000e+30 : f32
    %24 = vector.broadcast %cst_15 : f32 to vector<8x128xf32>
    %25 = arith.select %23, %20, %24 : vector<8x128xi1>, vector<8x128xf32>
    %cst_16 = arith.constant dense<0xFF800000> : vector<8xf32>
    %26 = vector.multi_reduction <maximumf>, %25, %cst_16 [1] : vector<8x128xf32> to vector<8xf32>
    %27 = vector.shape_cast %26 : vector<8xf32> to vector<8x1xf32>
    %28 = vector.broadcast %27 : vector<8x1xf32> to vector<8x128xf32>
    %29 = arith.subf %25, %28 : vector<8x128xf32>
    %30 = math.exp %29 : vector<8x128xf32>
    %cst_17 = arith.constant dense<0.000000e+00> : vector<8xf32>
    %31 = vector.multi_reduction <add>, %30, %cst_17 [1] : vector<8x128xf32> to vector<8xf32>
    %32 = vector.shape_cast %31 : vector<8xf32> to vector<8x1xf32>
    %33 = math.log %32 : vector<8x1xf32>
    %34 = vector.broadcast %33 : vector<8x1xf32> to vector<8x128xf32>
    %35 = arith.subf %29, %34 : vector<8x128xf32>
    %c0_18 = arith.constant 0 : index
    %c0_19 = arith.constant 0 : index
    %36 = vector.load %arg8[%c0_18, %c0_19] : memref<8x128xf32, #tpu.memory_space<vmem>>, vector<8x128xf32>
    tpu.vector_store %arg8[%c0_18, %c0_19], %35 {strides = array<i32>} : memref<8x128xf32, #tpu.memory_space<vmem>>, vector<8x128xf32>,
    return
  }
  func.func @transform_0(%arg0: i32) -> (i32, i32) {
    %c0_i32 = arith.constant 0 : i32
    %c0_i32_0 = arith.constant 0 : i32
    return %arg0, %c0_i32 : i32, i32
  }
  func.func @transform_1(%arg0: i32) -> (i32, i32) {
    %c0_i32 = arith.constant 0 : i32
    %c0_i32_0 = arith.constant 0 : i32
    %c0_i32_1 = arith.constant 0 : i32
    return %c0_i32, %c0_i32_0 : i32, i32
  }
  func.func @transform_2(%arg0: i32) -> (i32, i32) {
    %c0_i32 = arith.constant 0 : i32
    %c0_i32_0 = arith.constant 0 : i32
    %c0_i32_1 = arith.constant 0 : i32
    return %c0_i32, %c0_i32_0 : i32, i32
  }
  func.func @transform_3(%arg0: i32) -> (i32, i32) {
    %c0_i32 = arith.constant 0 : i32
    %c0_i32_0 = arith.constant 0 : i32
    %c0_i32_1 = arith.constant 0 : i32
    return %c0_i32, %c0_i32_0 : i32, i32
  }
  func.func @transform_4(%arg0: i32) -> (i32, i32) {
    %c0_i32 = arith.constant 0 : i32
    %c0_i32_0 = arith.constant 0 : i32
    %c0_i32_1 = arith.constant 0 : i32
    return %c0_i32, %c0_i32_0 : i32, i32
  }
  func.func @transform_5(%arg0: i32) -> (i32, i32) {
    %c0_i32 = arith.constant 0 : i32
    %c0_i32_0 = arith.constant 0 : i32
    %c0_i32_1 = arith.constant 0 : i32
    return %c0_i32, %c0_i32_0 : i32, i32
  }
  func.func @transform_6(%arg0: i32) -> (i32, i32) {
    %c0_i32 = arith.constant 0 : i32
    %c0_i32_0 = arith.constant 0 : i32
    %c0_i32_1 = arith.constant 0 : i32
    return %c0_i32, %c0_i32_0 : i32, i32
  }
  func.func @transform_7(%arg0: i32) -> (i32, i32) {
    %c0_i32 = arith.constant 0 : i32
    %c0_i32_0 = arith.constant 0 : i32
    return %arg0, %c0_i32 : i32, i32
  }
}

</mosaic_0001>

<llo_original>
// kernel: tpu_custom_call.1
$region0: #{tpu_custom_call.1}
  #allocation0 [shape = 'u32[]', space=smem, size = 0x4, offset = 0x4, fixed_abs, tag = 'smem constant byte address 0x4 - core index']
  #allocation1 [shape = 'u32[72,128]{1,0:T(1,128)}', space=vmem, size = 0x9000, scoped, tag = 'internal scratch']
  %s0 = inlined_call_operand.hbm [shape: bf16[8,128], index: 0, kind: input, shape index: {}]
  %s1 = inlined_call_operand.hbm [shape: bf16[128,128], index: 1, kind: input, shape index: {}]
  %s2 = inlined_call_operand.vmem [shape: f32[1,128], index: 2, kind: input, shape index: {}]
  %s3 = inlined_call_operand.hbm [shape: bf16[128,128], index: 3, kind: input, shape index: {}]
  %s4 = inlined_call_operand.vmem [shape: f32[1,128], index: 4, kind: input, shape index: {}]
  %s5 = inlined_call_operand.hbm [shape: bf16[128,128], index: 5, kind: input, shape index: {}]
  %s6 = inlined_call_operand.vmem [shape: f32[1,128], index: 6, kind: input, shape index: {}]
  %s7 = inlined_call_operand.hbm [shape: f32[8,128], index: 7, kind: output, shape index: {}]
  %s8 = sld [smem:[#allocation0]]
  $region54: #{tpu_custom_call.1} parent=0
    _
  %s10 = ssub.s32 1, %s8
  %s11 = scalar_select 0, %s10, %s8
  $region1: #{tpu_custom_call.1} parent=0
    #allocation2 [shape = 'u8[2048]{0}', space=vmem, size = 0x800, scoped, tag = 'input window, operand 0, single buffered']
    #allocation3 [shape = 's32[1]{0}', space=sflag, size = 0x4, scoped, tag = 'scoped memory for tpu_custom_call.1']
    #allocation4 [shape = 's32[1]{0}', space=sflag, size = 0x4, scoped, tag = 'scoped memory for tpu_custom_call.1']
    #allocation5 [shape = 'u8[32768]{0}', space=vmem, size = 0x8000, scoped, tag = 'input window, operand 1, single buffered']
    #allocation6 [shape = 's32[1]{0}', space=sflag, size = 0x4, scoped, tag = 'scoped memory for tpu_custom_call.1']
    #allocation7 [shape = 'u8[32768]{0}', space=vmem, size = 0x8000, scoped, tag = 'input window, operand 3, single buffered']
    #allocation8 [shape = 'u8[32768]{0}', space=vmem, size = 0x8000, scoped, tag = 'input window, operand 5, single buffered']
    #allocation9 [shape = 's32[1]{0}', space=sflag, size = 0x4, scoped, tag = 'scoped memory for tpu_custom_call.1']
    #allocation10 [shape = 'u8[4096]{0}', space=vmem, size = 0x1000, scoped, tag = 'output window, operand 0, single buffered']
    %12 = vsyncpa [#allocation3], 0
    %13 = vsyncpa [#allocation6], 0
    %14 = vsyncpa [#allocation9], 0
    %15 = vsyncpa [#allocation4], 0
    // Predicated region
    $region2: #{tpu_custom_call.1} parent=1 // pred_check
      _
    $region3: #{tpu_custom_call.1} parent=1 // pred_check_branch
      %17 = sbr.rel (0) target = $region5
    $region4: #{tpu_custom_call.1} parent=1 // pred_region
      %19 = vsyncadd [#allocation3], 0
      %s21 = sshll.u32 %s0, 4
      %s22 = int_to_ptr.hbm [resolvable:$true] %s21
      %s23 = sshll.u32 [#allocation2], 4
      %s24 = int_to_ptr.vmem [resolvable:$true] %s23
      %26 = dma.hbm_to_vmem [thread:$0]  %s22, 64, %s24, [#allocation3]
    $region5: #{tpu_custom_call.1} parent=1 // pred_fallthru
      _
    // Predicated region
    $region6: #{tpu_custom_call.1} parent=1 // pred_check
      _
    $region7: #{tpu_custom_call.1} parent=1 // pred_check_branch
      %28 = sbr.rel (0) target = $region9
    $region8: #{tpu_custom_call.1} parent=1 // pred_region
      %30 = vsyncadd [#allocation6], 0
      %s31 = sshll.u32 %s1, 4
      %s32 = int_to_ptr.hbm [resolvable:$true] %s31
      %s33 = sshll.u32 [#allocation5], 4
      %s34 = int_to_ptr.vmem [resolvable:$true] %s33
      %39 = dma.hbm_to_vmem [thread:$0]  %s32, 1024, %s34, [#allocation6], 64, 64, 4
    $region9: #{tpu_custom_call.1} parent=1 // pred_fallthru
      _
    // Predicated region
    $region10: #{tpu_custom_call.1} parent=1 // pred_check
      _
    $region11: #{tpu_custom_call.1} parent=1 // pred_check_branch
      %41 = sbr.rel (0) target = $region13
    $region12: #{tpu_custom_call.1} parent=1 // pred_region
      _
    $region13: #{tpu_custom_call.1} parent=1 // pred_fallthru
      _
    // Predicated region
    $region14: #{tpu_custom_call.1} parent=1 // pred_check
      _
    $region15: #{tpu_custom_call.1} parent=1 // pred_check_branch
      %43 = sbr.rel (0) target = $region17
    $region16: #{tpu_custom_call.1} parent=1 // pred_region
      %45 = vsyncadd [#allocation6], 0
      %s46 = sshll.u32 %s3, 4
      %s47 = int_to_ptr.hbm [resolvable:$true] %s46
      %s48 = sshll.u32 [#allocation7], 4
      %s49 = int_to_ptr.vmem [resolvable:$true] %s48
      %54 = dma.hbm_to_vmem [thread:$0]  %s47, 1024, %s49, [#allocation6], 64, 64, 4
    $region17: #{tpu_custom_call.1} parent=1 // pred_fallthru
      _
    // Predicated region
    $region18: #{tpu_custom_call.1} parent=1 // pred_check
      _
    $region19: #{tpu_custom_call.1} parent=1 // pred_check_branch
      %56 = sbr.rel (0) target = $region21
    $region20: #{tpu_custom_call.1} parent=1 // pred_region
      _
    $region21: #{tpu_custom_call.1} parent=1 // pred_fallthru
      _
    // Predicated region
    $region22: #{tpu_custom_call.1} parent=1 // pred_check
      _
    $region23: #{tpu_custom_call.1} parent=1 // pred_check_branch
      %58 = sbr.rel (0) target = $region25
    $region24: #{tpu_custom_call.1} parent=1 // pred_region
      %60 = vsyncadd [#allocation9], 0
      %s61 = sshll.u32 %s5, 4
      %s62 = int_to_ptr.hbm [resolvable:$true] %s61
      %s63 = sshll.u32 [#allocation8], 4
      %s64 = int_to_ptr.vmem [resolvable:$true] %s63
      %69 = dma.hbm_to_vmem [thread:$0]  %s62, 1024, %s64, [#allocation9], 64, 64, 4
    $region25: #{tpu_custom_call.1} parent=1 // pred_fallthru
      _
    // Predicated region
    $region26: #{tpu_custom_call.1} parent=1 // pred_check
      _
    $region27: #{tpu_custom_call.1} parent=1 // pred_check_branch
      %71 = sbr.rel (0) target = $region29
    $region28: #{tpu_custom_call.1} parent=1 // pred_region
      _
    $region29: #{tpu_custom_call.1} parent=1 // pred_fallthru
      _
    // Predicated region
    $region30: #{tpu_custom_call.1} parent=1 // pred_check
      _
    $region31: #{tpu_custom_call.1} parent=1 // pred_check_branch
      %73 = sbr.rel (0) target = $region33
    $region32: #{tpu_custom_call.1} parent=1 // pred_region
      %75 = dma.done [#allocation3], 64
    $region33: #{tpu_custom_call.1} parent=1 // pred_fallthru
      _
    // Predicated region
    $region34: #{tpu_custom_call.1} parent=1 // pred_check
      _
    $region35: #{tpu_custom_call.1} parent=1 // pred_check_branch
      %77 = sbr.rel (0) target = $region37
    $region36: #{tpu_custom_call.1} parent=1 // pred_region
      %79 = dma.done [#allocation6], 1024
    $region37: #{tpu_custom_call.1} parent=1 // pred_fallthru
      _
    // Predicated region
    $region38: #{tpu_custom_call.1} parent=1 // pred_check
      _
    $region39: #{tpu_custom_call.1} parent=1 // pred_check_branch
      %81 = sbr.rel (0) target = $region41
    $region40: #{tpu_custom_call.1} parent=1 // pred_region
      %83 = dma.done [#allocation6], 1024
    $region41: #{tpu_custom_call.1} parent=1 // pred_fallthru
      _
    // Predicated region
    $region42: #{tpu_custom_call.1} parent=1 // pred_check
      _
    $region43: #{tpu_custom_call.1} parent=1 // pred_check_branch
      %85 = sbr.rel (0) target = $region45
    $region44: #{tpu_custom_call.1} parent=1 // pred_region
      %87 = dma.done [#allocation9], 1024
    $region45: #{tpu_custom_call.1} parent=1 // pred_fallthru
      _
    %v88 = vld [vmem:[#allocation2] sm:$0xf]
    %v89 = vld [vmem:[#allocation5] sm:$0xf]
    %v90 = vld [vmem:[#allocation5 + $0x4] sm:$0xf]
    %v91 = vld [vmem:[#allocation5 + $0x8] sm:$0xf]
    %v92 = vld [vmem:[#allocation5 + $0xc] sm:$0xf]
    %v93 = vld [vmem:[#allocation5 + $0x10] sm:$0xf]
    %v94 = vld [vmem:[#allocation5 + $0x14] sm:$0xf]
    %v95 = vld [vmem:[#allocation5 + $0x18] sm:$0xf]
    %v96 = vld [vmem:[#allocation5 + $0x1c] sm:$0xf]
    %v97 = vld [vmem:[#allocation5 + $0x20] sm:$0xf]
    %v98 = vld [vmem:[#allocation5 + $0x24] sm:$0xf]
    %v99 = vld [vmem:[#allocation5 + $0x28] sm:$0xf]
    %v100 = vld [vmem:[#allocation5 + $0x2c] sm:$0xf]
    %v101 = vld [vmem:[#allocation5 + $0x30] sm:$0xf]
    %v102 = vld [vmem:[#allocation5 + $0x34] sm:$0xf]
    %v103 = vld [vmem:[#allocation5 + $0x38] sm:$0xf]
    %v104 = vld [vmem:[#allocation5 + $0x3c] sm:$0xf]
    %v105 = vld [vmem:[%s2] sm:$0x1]
    %v107 = vperm.slane %v105, 0
    %v125 = vunpack.c.l.b16 %v89
    %v126 = vunpack.c.l.b16 %v90
    %v127 = vunpack.c.l.b16 %v91
    %v128 = vunpack.c.l.b16 %v92
    %v129 = vunpack.c.l.b16 %v93
    %v130 = vunpack.c.l.b16 %v94
    %v131 = vunpack.c.l.b16 %v95
    %v132 = vunpack.c.l.b16 %v96
    %v133 = vunpack.c.l.b16 %v97
    %v134 = vunpack.c.l.b16 %v98
    %v135 = vunpack.c.l.b16 %v99
    %v136 = vunpack.c.l.b16 %v100
    %v137 = vunpack.c.l.b16 %v101
    %v138 = vunpack.c.l.b16 %v102
    %v139 = vunpack.c.l.b16 %v103
    %v140 = vunpack.c.l.b16 %v104
    %v141 = vpack.c.b16 %v126, %v125
    %v142 = vpack.c.b16 %v128, %v127
    %v143 = vpack.c.b16 %v130, %v129
    %v144 = vpack.c.b16 %v132, %v131
    %v145 = vpack.c.b16 %v134, %v133
    %v146 = vpack.c.b16 %v136, %v135
    %v147 = vpack.c.b16 %v138, %v137
    %v148 = vpack.c.b16 %v140, %v139
    %157 = vmatpush.bf16.msra.mxu0 %v148
    %158 = vmatpush.bf16.msra.mxu0 %v147
    %159 = vmatpush.bf16.msra.mxu0 %v146
    %160 = vmatpush.bf16.msra.mxu0 %v145
    %161 = vmatpush.bf16.msra.mxu0 %v144
    %162 = vmatpush.bf16.msra.mxu0 %v143
    %163 = vmatpush.bf16.msra.mxu0 %v142
    %164 = vmatpush.bf16.msra.mxu0 %v141
    %165 = vmatmul.bf16.gmra.mxu0 %v88
    %v166 = vpop.f32.mrf.mxu0
    %v167 = vadd.f32 %v107, %v166
    %v168 = vpop.f32.mrf.mxu0
    %169 = vdwg.mxu0
    %v170 = vtanh.pop %v167
    %v171 = vpack.c.bf16 %v170, %v170
    %v172 = vld [vmem:[#allocation7] sm:$0xf]
    %v173 = vld [vmem:[#allocation7 + $0x4] sm:$0xf]
    %v174 = vld [vmem:[#allocation7 + $0x8] sm:$0xf]
    %v175 = vld [vmem:[#allocation7 + $0xc] sm:$0xf]
    %v176 = vld [vmem:[#allocation7 + $0x10] sm:$0xf]
    %v177 = vld [vmem:[#allocation7 + $0x14] sm:$0xf]
    %v178 = vld [vmem:[#allocation7 + $0x18] sm:$0xf]
    %v179 = vld [vmem:[#allocation7 + $0x1c] sm:$0xf]
    %v180 = vld [vmem:[#allocation7 + $0x20] sm:$0xf]
    %v181 = vld [vmem:[#allocation7 + $0x24] sm:$0xf]
    %v182 = vld [vmem:[#allocation7 + $0x28] sm:$0xf]
    %v183 = vld [vmem:[#allocation7 + $0x2c] sm:$0xf]
    %v184 = vld [vmem:[#allocation7 + $0x30] sm:$0xf]
    %v185 = vld [vmem:[#allocation7 + $0x34] sm:$0xf]
    %v186 = vld [vmem:[#allocation7 + $0x38] sm:$0xf]
    %v187 = vld [vmem:[#allocation7 + $0x3c] sm:$0xf]
    %v188 = vld [vmem:[%s4] sm:$0x1]
    %v190 = vperm.slane %v188, 0
    %v208 = vunpack.c.l.b16 %v172
    %v209 = vunpack.c.l.b16 %v173
    %v210 = vunpack.c.l.b16 %v174
    %v211 = vunpack.c.l.b16 %v175
    %v212 = vunpack.c.l.b16 %v176
    %v213 = vunpack.c.l.b16 %v177
    %v214 = vunpack.c.l.b16 %v178
    %v215 = vunpack.c.l.b16 %v179
    %v216 = vunpack.c.l.b16 %v180
    %v217 = vunpack.c.l.b16 %v181
    %v218 = vunpack.c.l.b16 %v182
    %v219 = vunpack.c.l.b16 %v183
    %v220 = vunpack.c.l.b16 %v184
    %v221 = vunpack.c.l.b16 %v185
    %v222 = vunpack.c.l.b16 %v186
    %v223 = vunpack.c.l.b16 %v187
    %v224 = vpack.c.b16 %v209, %v208
    %v225 = vpack.c.b16 %v211, %v210
    %v226 = vpack.c.b16 %v213, %v212
    %v227 = vpack.c.b16 %v215, %v214
    %v228 = vpack.c.b16 %v217, %v216
    %v229 = vpack.c.b16 %v219, %v218
    %v230 = vpack.c.b16 %v221, %v220
    %v231 = vpack.c.b16 %v223, %v222
    %240 = vmatpush.bf16.msra.mxu0 %v231
    %241 = vmatpush.bf16.msra.mxu0 %v230
    %242 = vmatpush.bf16.msra.mxu0 %v229
    %243 = vmatpush.bf16.msra.mxu0 %v228
    %244 = vmatpush.bf16.msra.mxu0 %v227
    %245 = vmatpush.bf16.msra.mxu0 %v226
    %246 = vmatpush.bf16.msra.mxu0 %v225
    %247 = vmatpush.bf16.msra.mxu0 %v224
    %248 = vmatmul.bf16.gmra.mxu0 %v171
    %v249 = vpop.f32.mrf.mxu0
    %v250 = vadd.f32 %v190, %v249
    %v251 = vpop.f32.mrf.mxu0
    %252 = vdwg.mxu0
    %v253 = vtanh.pop %v250
    %v254 = vpack.c.bf16 %v253, %v253
    %v255 = vld [vmem:[#allocation8] sm:$0xf]
    %v256 = vld [vmem:[#allocation8 + $0x4] sm:$0xf]
    %v257 = vld [vmem:[#allocation8 + $0x8] sm:$0xf]
    %v258 = vld [vmem:[#allocation8 + $0xc] sm:$0xf]
    %v259 = vld [vmem:[#allocation8 + $0x10] sm:$0xf]
    %v260 = vld [vmem:[#allocation8 + $0x14] sm:$0xf]
    %v261 = vld [vmem:[#allocation8 + $0x18] sm:$0xf]
    %v262 = vld [vmem:[#allocation8 + $0x1c] sm:$0xf]
    %v263 = vld [vmem:[#allocation8 + $0x20] sm:$0xf]
    %v264 = vld [vmem:[#allocation8 + $0x24] sm:$0xf]
    %v265 = vld [vmem:[#allocation8 + $0x28] sm:$0xf]
    %v266 = vld [vmem:[#allocation8 + $0x2c] sm:$0xf]
    %v267 = vld [vmem:[#allocation8 + $0x30] sm:$0xf]
    %v268 = vld [vmem:[#allocation8 + $0x34] sm:$0xf]
    %v269 = vld [vmem:[#allocation8 + $0x38] sm:$0xf]
    %v270 = vld [vmem:[#allocation8 + $0x3c] sm:$0xf]
    %v271 = vld [vmem:[%s6] sm:$0x1]
    %v273 = vperm.slane %v271, 0
    %v291 = vunpack.c.l.b16 %v255
    %v292 = vunpack.c.l.b16 %v256
    %v293 = vunpack.c.l.b16 %v257
    %v294 = vunpack.c.l.b16 %v258
    %v295 = vunpack.c.l.b16 %v259
    %v296 = vunpack.c.l.b16 %v260
    %v297 = vunpack.c.l.b16 %v261
    %v298 = vunpack.c.l.b16 %v262
    %v299 = vunpack.c.l.b16 %v263
    %v300 = vunpack.c.l.b16 %v264
    %v301 = vunpack.c.l.b16 %v265
    %v302 = vunpack.c.l.b16 %v266
    %v303 = vunpack.c.l.b16 %v267
    %v304 = vunpack.c.l.b16 %v268
    %v305 = vunpack.c.l.b16 %v269
    %v306 = vunpack.c.l.b16 %v270
    %v307 = vpack.c.b16 %v292, %v291
    %v308 = vpack.c.b16 %v294, %v293
    %v309 = vpack.c.b16 %v296, %v295
    %v310 = vpack.c.b16 %v298, %v297
    %v311 = vpack.c.b16 %v300, %v299
    %v312 = vpack.c.b16 %v302, %v301
    %v313 = vpack.c.b16 %v304, %v303
    %v314 = vpack.c.b16 %v306, %v305
    %323 = vmatpush.bf16.msra.mxu0 %v314
    %324 = vmatpush.bf16.msra.mxu0 %v313
    %325 = vmatpush.bf16.msra.mxu0 %v312
    %326 = vmatpush.bf16.msra.mxu0 %v311
    %327 = vmatpush.bf16.msra.mxu0 %v310
    %328 = vmatpush.bf16.msra.mxu0 %v309
    %329 = vmatpush.bf16.msra.mxu0 %v308
    %330 = vmatpush.bf16.msra.mxu0 %v307
    %331 = vmatmul.bf16.gmra.mxu0 %v254
    %v332 = vpop.f32.mrf.mxu0
    %v333 = vadd.f32 %v273, %v332
    %v334 = vpop.f32.mrf.mxu0
    %335 = vdwg.mxu0
    %v336 = vtanh.pop %v333
    %v337 = vlaneseq
    %v338 = vand.u32 %v337, 127
    %vm339 = vcmp.lt.s32.totalorder %v338, 16
    %v340 = vsel %vm339, %v336, -1e+30
    %341 = vmax.xlane.f32.xlu0 %v340
    %v342 = vpop.xlane.xlu0 %341
    %v343 = vsub.f32 %v340, %v342
    %v344 = vmul.f32 %v343, 1.442695
    %v345 = vpow.pop %v344
    %346 = vadd.xlane.f32.xlu0 %v345
    %v347 = vpop.xlane.xlu0 %346
    %v348 = vlog2.pop %v347
    %v349 = vmul.f32 %v348, 0.6931472
    %v350 = vsub.f32 %v343, %v349
    %351 = vst [vmem:[#allocation10] sm:$0xff] %v350
    // Predicated region
    $region46: #{tpu_custom_call.1} parent=1 // pred_check
      _
    $region47: #{tpu_custom_call.1} parent=1 // pred_check_branch
      %353 = sbr.rel (0) target = $region49
    $region48: #{tpu_custom_call.1} parent=1 // pred_region
      %355 = vsyncadd [#allocation4], 0
      %s357 = sshll.u32 [#allocation10], 4
      %s358 = int_to_ptr.vmem [resolvable:$true] %s357
      %s359 = sshll.u32 %s7, 4
      %s360 = int_to_ptr.hbm [resolvable:$true] %s359
      %362 = dma.vmem_to_hbm [thread:$0]  %s358, 128, %s360, [#allocation4]
    $region49: #{tpu_custom_call.1} parent=1 // pred_fallthru
      _
    // Predicated region
    $region50: #{tpu_custom_call.1} parent=1 // pred_check
      _
    $region51: #{tpu_custom_call.1} parent=1 // pred_check_branch
      %364 = sbr.rel (0) target = $region53
    $region52: #{tpu_custom_call.1} parent=1 // pred_region
      %366 = dma.done [#allocation4], 128
    $region53: #{tpu_custom_call.1} parent=1 // pred_fallthru
      _
    %367 = vsyncpa [#allocation3], 1
    %368 = vsyncpa [#allocation6], 1
    %369 = vsyncpa [#allocation9], 1
    %370 = vsyncpa [#allocation4], 1

</llo_original>
